<compile_context>
chip_gen: v7x
topology: tpu7x:2x2x1
jax: 0.10.0
libtpu: 0.0.40
codegen_flags: <defaults>
</compile_context>

<pallas_src>
import jax
import jax.numpy as jnp
from jax.experimental import pallas as pl
from jax.experimental.pallas import tpu as pltpu


def _constant_input_kernel(param_ref, out_ref):
    # param_ref: (1, F_TILE) or (1, y_dim, d_model) VMEM-resident constant.
    # out_ref:   (B_TILE, ...) output block; broadcast down the batch axis and
    #            let the output DMA stream it to HBM.
    out_ref[...] = jnp.broadcast_to(param_ref[...], out_ref.shape)


def _device_info():
    """Best-effort (VMEM capacity bytes, TensorCores-per-chip)."""
    kind = ""
    try:
        kind = jax.devices()[0].device_kind.lower()
    except Exception:  # pragma: no cover - defensive
        pass
    is_v7 = "v7" in kind
    vmem_cap = None
    try:
        vmem_cap = int(pltpu.get_tpu_info().vmem_capacity_bytes)
    except Exception:  # pragma: no cover - defensive
        vmem_cap = None
    if vmem_cap is None or vmem_cap <= 0:
        vmem_cap = (64 << 20) if is_v7 else (128 << 20)
    num_tc = 2 if is_v7 else 1
    return vmem_cap, num_tc


def _pick_tiles(batch, feat, itemsize, block_budget, num_tc):
    """Pick (b_tile, f_tile): multi-MiB, lane/sublane-aligned output blocks."""
    sub = max(8, 32 // itemsize)  # dtype-native sublane multiple (8/16/32)

    # Feature (lane) tile: full feat unless even `sub` rows of it would exceed
    # the block budget; then tile lanes in multiples of 128 (2-D grid).
    f_tile = feat
    if feat % 128 == 0:
        max_f = max(128, (block_budget // (sub * itemsize) // 128) * 128)
        if feat > max_f:
            f_tile = max_f

    # Batch (sublane) tile.
    if batch <= sub:
        b_tile = batch  # full-extent block along batch is always legal
    else:
        b_tile = block_budget // max(f_tile * itemsize, 1)
        b_tile = max(sub, (b_tile // sub) * sub)
        b_tile = min(b_tile, batch)
        b_tile = max(sub, (b_tile // sub) * sub)
        # Split only for multi-TC chips (v7x): on 1-TC v5e/v6e a forced split
        # just adds ~0.35 us of grid-step overhead to a mem-bound kernel.
        n_steps = pl.cdiv(batch, b_tile) * pl.cdiv(feat, f_tile)
        if num_tc > 1 and n_steps < num_tc:
            b_tile = max(sub, (pl.cdiv(batch, num_tc) // sub) * sub)
    return b_tile, f_tile


def _vmem_limit(block_bytes, param_bytes, vmem_cap):
    # Double-buffered output block + (up to double-buffered) param + margin,
    # clamped below physical VMEM.
    need = 2 * block_bytes + 2 * param_bytes + (4 << 20)
    return int(min(max(need, 16 << 20), vmem_cap - (2 << 20)))


def constant_input_forward(x, param, *, force_pallas: bool = False):
    """Replicates ConstantInput.forward: out = param.repeat(batch, 1, 1)."""
    batch = x.shape[0]
    _, y_dim, d_model = param.shape
    feat = y_dim * d_model
    itemsize = jnp.dtype(param.dtype).itemsize
    out_shape3d = (batch, y_dim, d_model)
    out_bytes = batch * feat * itemsize

    # Small outputs: XLA's broadcast hits the same roofline and usually fuses
    # into the consumer (no materialization at all).  Pallas only for large
    # materialized outputs or when forced (test harness).
    if not force_pallas and out_bytes < (4 << 20):
        return jnp.broadcast_to(param, out_shape3d)

    vmem_cap, num_tc = _device_info()
    param_bytes = feat * itemsize
    cap = (24 << 20) if num_tc > 1 else (32 << 20)  # v7x: 64 MiB physical VMEM
    block_budget = max(1 << 20, min(cap, (vmem_cap - param_bytes - (4 << 20)) // 2))

    if feat % 128 == 0:
        # Lane-dense flat layout: feat on lanes (full-width vst), batch on
        # sublanes; contiguous reshape back to 3-D afterwards is free.
        b_tile, f_tile = _pick_tiles(batch, feat, itemsize, block_budget, num_tc)
        grid = (pl.cdiv(batch, b_tile), pl.cdiv(feat, f_tile))
        block_bytes = b_tile * f_tile * itemsize

        if param_bytes >= (1 << 20):
            # Constant index_map → never re-fetched; single-buffer it to
            # reclaim VMEM for the output block (matters for very large feat).
            param_spec = pl.BlockSpec((1, f_tile), lambda b, f: (0, f),
                                      pipeline_mode=pl.Buffered(1))
        else:
            param_spec = pl.BlockSpec((1, f_tile), lambda b, f: (0, f))

        out2d = pl.pallas_call(
            _constant_input_kernel,
            out_shape=jax.ShapeDtypeStruct((batch, feat), param.dtype),
            grid_spec=pltpu.PrefetchScalarGridSpec(
                num_scalar_prefetch=0,
                grid=grid,
                in_specs=[param_spec],
                out_specs=pl.BlockSpec((b_tile, f_tile), lambda b, f: (b, f)),
            ),
            compiler_params=pltpu.CompilerParams(
                dimension_semantics=("parallel", "parallel"),
                vmem_limit_bytes=_vmem_limit(block_bytes, param_bytes, vmem_cap),
            ),
        )(param.reshape(1, feat))
        return out2d.reshape(out_shape3d)

    # Ragged feature width (feat not a multiple of 128): keep d_model on the
    # lane axis and broadcast whole (y_dim, d_model) slabs per batch tile.
    # Correct for any shape; stores are masked only if d_model itself is not
    # 128-aligned (unavoidable without padding the logical output).
    b_tile, _ = _pick_tiles(batch, feat, itemsize, block_budget, num_tc)
    block_bytes = b_tile * feat * itemsize
    return pl.pallas_call(
        _constant_input_kernel,
        out_shape=jax.ShapeDtypeStruct(out_shape3d, param.dtype),
        grid_spec=pltpu.PrefetchScalarGridSpec(
            num_scalar_prefetch=0,
            grid=(pl.cdiv(batch, b_tile),),
            in_specs=[pl.BlockSpec((1, y_dim, d_model), lambda b: (0, 0, 0))],
            out_specs=pl.BlockSpec((b_tile, y_dim, d_model), lambda b: (b, 0, 0)),
        ),
        compiler_params=pltpu.CompilerParams(
            dimension_semantics=("parallel",),
            vmem_limit_bytes=_vmem_limit(block_bytes, param_bytes, vmem_cap),
        ),
    )(param)


if __name__ == "__main__":
    key = jax.random.PRNGKey(0)
    k_param, k_x, k_param2 = jax.random.split(key, 3)

    # --- Test 1: lane-dense path (feat = y_dim*d_model multiple of 128) ------
    y_dim, d_model, batch = 8, 128, 2
    # PyTorch init is zeros; use random values so the broadcast is verifiable.
    param = jax.random.normal(k_param, (1, y_dim, d_model), dtype=jnp.float32)
    x = jax.random.normal(k_x, (batch, 4, 16, 16), dtype=jnp.float32)

    out = jax.block_until_ready(constant_input_forward(x, param, force_pallas=True))
    ref = jnp.broadcast_to(param, (batch, y_dim, d_model))
    assert out.shape == (batch, y_dim, d_model), out.shape
    assert out.dtype == param.dtype
    assert jnp.array_equal(out, ref)

    # --- Test 2: ragged-feature 3-D path (feat not a multiple of 128) --------
    y_dim2, d_model2, batch2 = 3, 20, 4
    param2 = jax.random.normal(k_param2, (1, y_dim2, d_model2), dtype=jnp.float32)
    x2 = jnp.zeros((batch2, 4, 16, 16), dtype=jnp.float32)
    out2 = jax.block_until_ready(constant_input_forward(x2, param2, force_pallas=True))
    assert jnp.array_equal(out2, jnp.broadcast_to(param2, (batch2, y_dim2, d_model2)))

    # --- Test 3: small-output dispatch path (jnp.broadcast_to fallback) ------
    out_small = jax.block_until_ready(constant_input_forward(x, param))
    assert jnp.array_equal(out_small, ref)

    print("KERNEL_OK")
</pallas_src>

<mosaic_0001>
module attributes {stable_mosaic.version = 11 : i64} {
  func.func @_constant_input_kernel(%arg0: i32, %arg1: i32, %arg2: memref<1x1024xf32, #tpu.memory_space<vmem>>, %arg3: memref<2x1024xf32, #tpu.memory_space<vmem>>) attributes {dimension_semantics = [#tpu.dimension_semantics<parallel>, #tpu.dimension_semantics<parallel>], iteration_bounds = array<i64: 1, 1>, scalar_prefetch = 0 : i64, scratch_operands = 0 : i64, tpu.core_type = #tpu.core_type<tc>, window_params = [{transform_indices = @transform_0, window_bounds = array<i64: 1, 1024>}, {transform_indices = @transform_1, window_bounds = array<i64: 2, 1024>}]} {
    %c0 = arith.constant 0 : index
    %c0_0 = arith.constant 0 : index
    %0 = vector.load %arg2[%c0, %c0_0] : memref<1x1024xf32, #tpu.memory_space<vmem>>, vector<1x1024xf32>
    %1 = vector.shape_cast %0 : vector<1x1024xf32> to vector<1x1024xf32>
    %2 = vector.broadcast %1 : vector<1x1024xf32> to vector<2x1024xf32>
    %c0_1 = arith.constant 0 : index
    %c0_2 = arith.constant 0 : index
    %3 = vector.load %arg3[%c0_1, %c0_2] : memref<2x1024xf32, #tpu.memory_space<vmem>>, vector<2x1024xf32>
    tpu.vector_store %arg3[%c0_1, %c0_2], %2 {strides = array<i32>} : memref<2x1024xf32, #tpu.memory_space<vmem>>, vector<2x1024xf32>,
    return
  }
  func.func @transform_0(%arg0: i32, %arg1: i32) -> (i32, i32) {
    %c0_i32 = arith.constant 0 : i32
    %c0_i32_0 = arith.constant 0 : i32
    return %c0_i32, %arg1 : i32, i32
  }
  func.func @transform_1(%arg0: i32, %arg1: i32) -> (i32, i32) {
    %c0_i32 = arith.constant 0 : i32
    return %arg0, %arg1 : i32, i32
  }
}

</mosaic_0001>

<llo_original>
// kernel: tpu_custom_call.1
$region0: #{tpu_custom_call.1}
  #allocation0 [shape = 'u32[]', space=smem, size = 0x4, offset = 0x4, fixed_abs, tag = 'smem constant byte address 0x4 - core index']
  #allocation1 [shape = 'u32[144,128]{1,0:T(1,128)}', space=vmem, size = 0x12000, scoped, tag = 'internal scratch']
  %s0 = inlined_call_operand.hbm [shape: f32[1,1024], index: 0, kind: input, shape index: {}]
  %s1 = inlined_call_operand.hbm [shape: f32[2,1024], index: 1, kind: output, shape index: {}]
  %s2 = sld [smem:[#allocation0]]
  $region18: #{tpu_custom_call.1} parent=0
    _
  %s4 = ssub.s32 1, %s2
  %s5 = scalar_select 0, %s4, %s2
  $region1: #{tpu_custom_call.1} parent=0
    #allocation2 [shape = 'u8[4096]{0}', space=vmem, size = 0x1000, scoped, tag = 'input window, operand 0, single buffered']
    #allocation3 [shape = 's32[1]{0}', space=sflag, size = 0x4, scoped, tag = 'scoped memory for tpu_custom_call.1']
    #allocation4 [shape = 's32[1]{0}', space=sflag, size = 0x4, scoped, tag = 'scoped memory for tpu_custom_call.1']
    #allocation5 [shape = 'u8[8192]{0}', space=vmem, size = 0x2000, scoped, tag = 'output window, operand 0, single buffered']
    %6 = vsyncpa [#allocation3], 0
    %7 = vsyncpa [#allocation4], 0
    // Predicated region
    $region2: #{tpu_custom_call.1} parent=1 // pred_check
      _
    $region3: #{tpu_custom_call.1} parent=1 // pred_check_branch
      %9 = sbr.rel (0) target = $region5
    $region4: #{tpu_custom_call.1} parent=1 // pred_region
      %s11 = ssub.s32 128, 128
      %12 = vsyncadd [#allocation3], %s11
      %s14 = sshll.u32 [#allocation2], 4
      %s15 = int_to_ptr.vmem [resolvable:$true] %s14
      %17 = dma.hbm_to_vmem [thread:$0]  %s0, 128, %s15, [#allocation3]
    $region5: #{tpu_custom_call.1} parent=1 // pred_fallthru
      _
    // Predicated region
    $region6: #{tpu_custom_call.1} parent=1 // pred_check
      _
    $region7: #{tpu_custom_call.1} parent=1 // pred_check_branch
      %19 = sbr.rel (0) target = $region9
    $region8: #{tpu_custom_call.1} parent=1 // pred_region
      %20 = dma.done [#allocation3], 128
    $region9: #{tpu_custom_call.1} parent=1 // pred_fallthru
      _
    %v21 = vld [vmem:[#allocation2] sm:$0xff]
    %v23 = vlaneseq
    %v24 = vshrl.u32 %v23, 7
    %v25 = vsub.s32 0, %v24
    %v26 = vrot.slane %v21, %v25
    %v27 = vlaneseq
    %v28 = vshrl.u32 %v27, 7
    %v29 = vsub.s32 1, %v28
    %v30 = vrot.slane %v21, %v29
    %v31 = vlaneseq
    %v32 = vshrl.u32 %v31, 7
    %v33 = vsub.s32 2, %v32
    %v34 = vrot.slane %v21, %v33
    %v35 = vlaneseq
    %v36 = vshrl.u32 %v35, 7
    %v37 = vsub.s32 3, %v36
    %v38 = vrot.slane %v21, %v37
    %v39 = vlaneseq
    %v40 = vshrl.u32 %v39, 7
    %v41 = vsub.s32 4, %v40
    %v42 = vrot.slane %v21, %v41
    %v43 = vlaneseq
    %v44 = vshrl.u32 %v43, 7
    %v45 = vsub.s32 5, %v44
    %v46 = vrot.slane %v21, %v45
    %v47 = vlaneseq
    %v48 = vshrl.u32 %v47, 7
    %v49 = vsub.s32 6, %v48
    %v50 = vrot.slane %v21, %v49
    %v51 = vlaneseq
    %v52 = vshrl.u32 %v51, 7
    %v53 = vsub.s32 7, %v52
    %v54 = vrot.slane %v21, %v53
    %v55 = vcombine.low %v26, %v30
    %v56 = vcombine.low %v34, %v38
    %v58 = vunpack.c.l.s4 1983009808
    %v59 = vunpack.c.0.s8 %v58
    %v60 = vlaneseq
    %v61 = vshrl.u32 %v60, 7
    %v62 = vsub.s32 %v59, %v61
    %v63 = vrot.slane %v55, %v62
    %v65 = vunpack.c.l.s4 1983009808
    %v66 = vunpack.c.0.s8 %v65
    %v67 = vlaneseq
    %v68 = vshrl.u32 %v67, 7
    %v69 = vsub.s32 %v66, %v68
    %v70 = vrot.slane %v56, %v69
    %v71 = vcombine.low %v63, %v70
    %v72 = vcombine.low %v42, %v46
    %v73 = vcombine.low %v50, %v54
    %v75 = vunpack.c.l.s4 1983009808
    %v76 = vunpack.c.0.s8 %v75
    %v77 = vlaneseq
    %v78 = vshrl.u32 %v77, 7
    %v79 = vsub.s32 %v76, %v78
    %v80 = vrot.slane %v72, %v79
    %v82 = vunpack.c.l.s4 1983009808
    %v83 = vunpack.c.0.s8 %v82
    %v84 = vlaneseq
    %v85 = vshrl.u32 %v84, 7
    %v86 = vsub.s32 %v83, %v85
    %v87 = vrot.slane %v73, %v86
    %v88 = vcombine.low %v80, %v87
    %91 = vst [vmem:[#allocation5] sm:$0xff] %v71
    %92 = vst [vmem:[#allocation5 + $0x8] sm:$0xff] %v88
    // Predicated region
    $region10: #{tpu_custom_call.1} parent=1 // pred_check
      _
    $region11: #{tpu_custom_call.1} parent=1 // pred_check_branch
      %94 = sbr.rel (0) target = $region13
    $region12: #{tpu_custom_call.1} parent=1 // pred_region
      %s96 = ssub.s32 256, 256
      %97 = vsyncadd [#allocation4], %s96
      %s99 = sshll.u32 [#allocation5], 4
      %s100 = int_to_ptr.vmem [resolvable:$true] %s99
      %102 = dma.vmem_to_hbm [thread:$0]  %s100, 256, %s1, [#allocation4]
    $region13: #{tpu_custom_call.1} parent=1 // pred_fallthru
      _
    // Predicated region
    $region14: #{tpu_custom_call.1} parent=1 // pred_check
      _
    $region15: #{tpu_custom_call.1} parent=1 // pred_check_branch
      %104 = sbr.rel (0) target = $region17
    $region16: #{tpu_custom_call.1} parent=1 // pred_region
      %105 = dma.done [#allocation4], 256
    $region17: #{tpu_custom_call.1} parent=1 // pred_fallthru
      _
    %106 = vsyncpa [#allocation3], 1
    %107 = vsyncpa [#allocation4], 1

</llo_original>
